<compile_context>
chip_gen: v6e
topology: v6e:2x2x1
jax: 0.10.0
libtpu: 0.0.40
codegen_flags: <defaults>
</compile_context>

<pallas_src>
import jax
import jax.numpy as jnp
from jax.experimental import pallas as pl
from jax.experimental.pallas import tpu as pltpu


def _mlp_kernel(x_ref, w1_ref, b1_ref, w2_ref, b2_ref, w3_ref, b3_ref, o_ref):
    # One batch tile per grid step; all three matmuls + biases + ReLUs fused.
    x = x_ref[...]  # bf16 [TB, 72]

    h1 = jnp.dot(x, w1_ref[...], preferred_element_type=jnp.float32) + b1_ref[...]
    h1 = jnp.maximum(h1, 0.0).astype(jnp.bfloat16)

    h2 = jnp.dot(h1, w2_ref[...], preferred_element_type=jnp.float32) + b2_ref[...]
    h2 = jnp.maximum(h2, 0.0).astype(jnp.bfloat16)

    h3 = jnp.dot(h2, w3_ref[...], preferred_element_type=jnp.float32) + b3_ref[...]
    o_ref[...] = h3.astype(o_ref.dtype)


def _round_up(n, m):
    return ((n + m - 1) // m) * m


def improved_model_forward(x, params, *, tb_max=4096, min_tiles=4):
    """x: [..., 12, 6] (anything whose trailing dims flatten to 72). Returns [B, 10]."""
    w1, b1, w2, b2, w3, b3 = params
    x2d = x.reshape(-1, 12 * 6)
    B = x2d.shape[0]

    # Stream x from HBM as bf16 (halves the dominant input stream); weights bf16 too.
    x_bf16 = x2d.astype(jnp.bfloat16)
    w1b = w1.astype(jnp.bfloat16)
    w2b = w2.astype(jnp.bfloat16)
    w3b = w3.astype(jnp.bfloat16)

    # Biases stay f32, shaped [1, out] so they broadcast against the f32 accumulators.
    b1_2d = b1.astype(jnp.float32).reshape(1, -1)
    b2_2d = b2.astype(jnp.float32).reshape(1, -1)
    b3_2d = b3.astype(jnp.float32).reshape(1, -1)

    # Batch tile: multiple of 8 (sublane legality), big enough to amortize the
    # ~0.35 us/step overhead, but capped at ~B/min_tiles so the grid keeps >=2-4
    # tiles (pipelining + v7x dual-core sharding) whenever B allows it.
    TB = min(tb_max, max(8, _round_up(pl.cdiv(B, min_tiles), 8)))
    num_tiles = pl.cdiv(B, TB)  # partial last block is masked on store; no jnp.pad copy

    # VMEM budget (lane-padded to 128 lanes): x bf16 double buffer + out f32 double
    # buffer + h1/h2/h3 f32 temporaries ~= 3 KiB/row, plus ~1 MiB params/scratch.
    per_row_bytes = 2 * (2 * 128) + 2 * (4 * 128) + 3 * (4 * 128)
    vmem_est = per_row_bytes * TB + (1 << 20)
    vmem_limit = int(min(max(2 * vmem_est, 32 * 1024 * 1024), 48 * 1024 * 1024))

    flops = 2 * B * (72 * 20 + 20 * 10 + 10 * 10)
    bytes_accessed = B * (72 * 2 + 10 * 4) + (72 * 20 + 20 * 10 + 10 * 10) * 2 + 40 * 4

    # Constant index maps -> parameters are loaded once and stay VMEM-resident.
    const2d = lambda arr: pl.BlockSpec(arr.shape, lambda i: (0, 0))

    out = pl.pallas_call(
        _mlp_kernel,
        out_shape=jax.ShapeDtypeStruct((B, 10), jnp.float32),
        grid=(num_tiles,),
        in_specs=[
            pl.BlockSpec((TB, 72), lambda i: (i, 0)),   # x: streamed batch tiles
            const2d(w1b), const2d(b1_2d),
            const2d(w2b), const2d(b2_2d),
            const2d(w3b), const2d(b3_2d),
        ],
        out_specs=pl.BlockSpec((TB, 10), lambda i: (i, 0)),
        compiler_params=pltpu.CompilerParams(
            dimension_semantics=("parallel",),
            vmem_limit_bytes=vmem_limit,
        ),
        cost_estimate=pl.CostEstimate(
            flops=flops, transcendentals=0, bytes_accessed=bytes_accessed),
    )(x_bf16, w1b, b1_2d, w2b, b2_2d, w3b, b3_2d)

    return out


def init_params(key):
    """Deterministic params. Weights returned already transposed to [in, out]."""
    k1, k2, k3, k4, k5, k6 = jax.random.split(key, 6)

    def linear(kw, kb, fan_in, fan_out):
        # Mimic PyTorch nn.Linear default init: U(-1/sqrt(fan_in), 1/sqrt(fan_in))
        bound = 1.0 / jnp.sqrt(fan_in)
        w = jax.random.uniform(kw, (fan_in, fan_out), jnp.float32, -bound, bound)
        b = jax.random.uniform(kb, (fan_out,), jnp.float32, -bound, bound)
        return w, b

    w1, b1 = linear(k1, k2, 12 * 6, 20)
    w2, b2 = linear(k3, k4, 20, 10)
    w3, b3 = linear(k5, k6, 10, 10)
    return (w1, b1, w2, b2, w3, b3)


def _reference_forward(x, params):
    w1, b1, w2, b2, w3, b3 = params
    h = x.reshape(-1, 72).astype(jnp.float32)
    h = jnp.maximum(h @ w1 + b1, 0.0)
    h = jnp.maximum(h @ w2 + b2, 0.0)
    return h @ w3 + b3


if __name__ == "__main__":
    key = jax.random.PRNGKey(0)
    kx, kx2, kp = jax.random.split(key, 3)

    params = init_params(kp)

    # Small batch shaped [B, 12, 6] — forward flattens to 12*6 = 72 features.
    x_small = jax.random.normal(kx, (2, 12, 6), dtype=jnp.float32)
    y_small = jax.block_until_ready(improved_model_forward(x_small, params))
    assert y_small.shape == (2, 10)
    # bf16 matmul operands (f32 accumulate): tolerance relaxed vs. pure-f32 reference.
    assert jnp.allclose(y_small, _reference_forward(x_small, params), atol=2e-2, rtol=2e-2)

    # Ragged larger batch to exercise the partial-last-block (no-pad) grid path.
    x_big = jax.random.normal(kx2, (300, 12, 6), dtype=jnp.float32)
    y_big = jax.block_until_ready(improved_model_forward(x_big, params, tb_max=128))
    assert y_big.shape == (300, 10)
    assert jnp.allclose(y_big, _reference_forward(x_big, params), atol=2e-2, rtol=2e-2)

    print("KERNEL_OK")
</pallas_src>

<mosaic_0001>
module attributes {stable_mosaic.version = 11 : i64} {
  func.func @_mlp_kernel(%arg0: i32, %arg1: memref<8x72xbf16, #tpu.memory_space<vmem>>, %arg2: memref<72x20xbf16, #tpu.memory_space<vmem>>, %arg3: memref<1x20xf32, #tpu.memory_space<vmem>>, %arg4: memref<20x10xbf16, #tpu.memory_space<vmem>>, %arg5: memref<1x10xf32, #tpu.memory_space<vmem>>, %arg6: memref<10x10xbf16, #tpu.memory_space<vmem>>, %arg7: memref<1x10xf32, #tpu.memory_space<vmem>>, %arg8: memref<8x10xf32, #tpu.memory_space<vmem>>) attributes {dimension_semantics = [#tpu.dimension_semantics<parallel>], iteration_bounds = array<i64: 1>, scalar_prefetch = 0 : i64, scratch_operands = 0 : i64, tpu.core_type = #tpu.core_type<tc>, window_params = [{transform_indices = @transform_0, window_bounds = array<i64: 8, 72>}, {pipeline_mode = #tpu.pipeline_mode<synchronous>, transform_indices = @transform_1, window_bounds = array<i64: 72, 20>}, {pipeline_mode = #tpu.pipeline_mode<synchronous>, transform_indices = @transform_2, window_bounds = array<i64: 1, 20>}, {pipeline_mode = #tpu.pipeline_mode<synchronous>, transform_indices = @transform_3, window_bounds = array<i64: 20, 10>}, {pipeline_mode = #tpu.pipeline_mode<synchronous>, transform_indices = @transform_4, window_bounds = array<i64: 1, 10>}, {pipeline_mode = #tpu.pipeline_mode<synchronous>, transform_indices = @transform_5, window_bounds = array<i64: 10, 10>}, {pipeline_mode = #tpu.pipeline_mode<synchronous>, transform_indices = @transform_6, window_bounds = array<i64: 1, 10>}, {transform_indices = @transform_7, window_bounds = array<i64: 8, 10>}]} {
    %c0 = arith.constant 0 : index
    %c0_0 = arith.constant 0 : index
    %0 = vector.load %arg1[%c0, %c0_0] : memref<8x72xbf16, #tpu.memory_space<vmem>>, vector<8x72xbf16>
    %c0_1 = arith.constant 0 : index
    %c0_2 = arith.constant 0 : index
    %1 = vector.load %arg2[%c0_1, %c0_2] : memref<72x20xbf16, #tpu.memory_space<vmem>>, vector<72x20xbf16>
    %cst = arith.constant dense<0.000000e+00> : vector<8x20xf32>
    %2 = tpu.matmul %0, %1, %cst {dimension_numbers = #tpu.dot_dimension_numbers<[1], [0], [0], [1], [0, 0, 1, 1], [], []>} : vector<8x72xbf16>, vector<72x20xbf16>, vector<8x20xf32> -> vector<8x20xf32>
    %c0_3 = arith.constant 0 : index
    %c0_4 = arith.constant 0 : index
    %3 = vector.load %arg3[%c0_3, %c0_4] : memref<1x20xf32, #tpu.memory_space<vmem>>, vector<1x20xf32>
    %4 = vector.broadcast %3 : vector<1x20xf32> to vector<8x20xf32>
    %5 = arith.addf %2, %4 : vector<8x20xf32>
    %cst_5 = arith.constant 0.000000e+00 : f32
    %6 = vector.broadcast %cst_5 : f32 to vector<8x20xf32>
    %7 = arith.maximumf %5, %6 : vector<8x20xf32>
    %8 = arith.truncf %7 : vector<8x20xf32> to vector<8x20xbf16>
    %c0_6 = arith.constant 0 : index
    %c0_7 = arith.constant 0 : index
    %9 = vector.load %arg4[%c0_6, %c0_7] : memref<20x10xbf16, #tpu.memory_space<vmem>>, vector<20x10xbf16>
    %cst_8 = arith.constant dense<0.000000e+00> : vector<8x10xf32>
    %10 = tpu.matmul %8, %9, %cst_8 {dimension_numbers = #tpu.dot_dimension_numbers<[1], [0], [0], [1], [0, 0, 1, 1], [], []>} : vector<8x20xbf16>, vector<20x10xbf16>, vector<8x10xf32> -> vector<8x10xf32>
    %c0_9 = arith.constant 0 : index
    %c0_10 = arith.constant 0 : index
    %11 = vector.load %arg5[%c0_9, %c0_10] : memref<1x10xf32, #tpu.memory_space<vmem>>, vector<1x10xf32>
    %12 = vector.broadcast %11 : vector<1x10xf32> to vector<8x10xf32>
    %13 = arith.addf %10, %12 : vector<8x10xf32>
    %cst_11 = arith.constant 0.000000e+00 : f32
    %14 = vector.broadcast %cst_11 : f32 to vector<8x10xf32>
    %15 = arith.maximumf %13, %14 : vector<8x10xf32>
    %16 = arith.truncf %15 : vector<8x10xf32> to vector<8x10xbf16>
    %c0_12 = arith.constant 0 : index
    %c0_13 = arith.constant 0 : index
    %17 = vector.load %arg6[%c0_12, %c0_13] : memref<10x10xbf16, #tpu.memory_space<vmem>>, vector<10x10xbf16>
    %cst_14 = arith.constant dense<0.000000e+00> : vector<8x10xf32>
    %18 = tpu.matmul %16, %17, %cst_14 {dimension_numbers = #tpu.dot_dimension_numbers<[1], [0], [0], [1], [0, 0, 1, 1], [], []>} : vector<8x10xbf16>, vector<10x10xbf16>, vector<8x10xf32> -> vector<8x10xf32>
    %c0_15 = arith.constant 0 : index
    %c0_16 = arith.constant 0 : index
    %19 = vector.load %arg7[%c0_15, %c0_16] : memref<1x10xf32, #tpu.memory_space<vmem>>, vector<1x10xf32>
    %20 = vector.broadcast %19 : vector<1x10xf32> to vector<8x10xf32>
    %21 = arith.addf %18, %20 : vector<8x10xf32>
    %c0_17 = arith.constant 0 : index
    %c0_18 = arith.constant 0 : index
    %22 = vector.load %arg8[%c0_17, %c0_18] : memref<8x10xf32, #tpu.memory_space<vmem>>, vector<8x10xf32>
    tpu.vector_store %arg8[%c0_17, %c0_18], %21 {strides = array<i32>} : memref<8x10xf32, #tpu.memory_space<vmem>>, vector<8x10xf32>,
    return
  }
  func.func @transform_0(%arg0: i32) -> (i32, i32) {
    %c0_i32 = arith.constant 0 : i32
    %c0_i32_0 = arith.constant 0 : i32
    return %arg0, %c0_i32 : i32, i32
  }
  func.func @transform_1(%arg0: i32) -> (i32, i32) {
    %c0_i32 = arith.constant 0 : i32
    %c0_i32_0 = arith.constant 0 : i32
    %c0_i32_1 = arith.constant 0 : i32
    return %c0_i32, %c0_i32_0 : i32, i32
  }
  func.func @transform_2(%arg0: i32) -> (i32, i32) {
    %c0_i32 = arith.constant 0 : i32
    %c0_i32_0 = arith.constant 0 : i32
    %c0_i32_1 = arith.constant 0 : i32
    return %c0_i32, %c0_i32_0 : i32, i32
  }
  func.func @transform_3(%arg0: i32) -> (i32, i32) {
    %c0_i32 = arith.constant 0 : i32
    %c0_i32_0 = arith.constant 0 : i32
    %c0_i32_1 = arith.constant 0 : i32
    return %c0_i32, %c0_i32_0 : i32, i32
  }
  func.func @transform_4(%arg0: i32) -> (i32, i32) {
    %c0_i32 = arith.constant 0 : i32
    %c0_i32_0 = arith.constant 0 : i32
    %c0_i32_1 = arith.constant 0 : i32
    return %c0_i32, %c0_i32_0 : i32, i32
  }
  func.func @transform_5(%arg0: i32) -> (i32, i32) {
    %c0_i32 = arith.constant 0 : i32
    %c0_i32_0 = arith.constant 0 : i32
    %c0_i32_1 = arith.constant 0 : i32
    return %c0_i32, %c0_i32_0 : i32, i32
  }
  func.func @transform_6(%arg0: i32) -> (i32, i32) {
    %c0_i32 = arith.constant 0 : i32
    %c0_i32_0 = arith.constant 0 : i32
    %c0_i32_1 = arith.constant 0 : i32
    return %c0_i32, %c0_i32_0 : i32, i32
  }
  func.func @transform_7(%arg0: i32) -> (i32, i32) {
    %c0_i32 = arith.constant 0 : i32
    %c0_i32_0 = arith.constant 0 : i32
    return %arg0, %c0_i32 : i32, i32
  }
}

</mosaic_0001>

<llo_original>
// kernel: tpu_custom_call.1
$region0: #{tpu_custom_call.1}
  #allocation0 [shape = 'u32[]', space=smem, size = 0x4, offset = 0x4, fixed_abs, tag = 'smem constant byte address 0x4 - core index']
  #allocation1 [shape = 'u32[144,128]{1,0:T(1,128)}', space=vmem, size = 0x12000, scoped, tag = 'internal scratch']
  %s0 = inlined_call_operand.vmem [shape: bf16[2,72], index: 0, kind: input, shape index: {}]
  %s1 = inlined_call_operand.vmem [shape: bf16[72,20], index: 1, kind: input, shape index: {}]
  %s2 = inlined_call_operand.vmem [shape: f32[1,20], index: 2, kind: input, shape index: {}]
  %s3 = inlined_call_operand.vmem [shape: bf16[20,10], index: 3, kind: input, shape index: {}]
  %s4 = inlined_call_operand.vmem [shape: f32[1,10], index: 4, kind: input, shape index: {}]
  %s5 = inlined_call_operand.vmem [shape: bf16[10,10], index: 5, kind: input, shape index: {}]
  %s6 = inlined_call_operand.vmem [shape: f32[1,10], index: 6, kind: input, shape index: {}]
  %s7 = inlined_call_operand.hbm [shape: f32[2,10], index: 7, kind: output, shape index: {}]
  %s8 = sld [smem:[#allocation0]]
  $region38: #{tpu_custom_call.1} parent=0
    _
  %s10 = ssub.s32 1, %s8
  %s11 = scalar_select 0, %s10, %s8
  $region1: #{tpu_custom_call.1} parent=0
    #allocation2 [shape = 'u8[4096]{0}', space=vmem, size = 0x1000, scoped, tag = 'output window, operand 0, single buffered']
    #allocation3 [shape = 's32[1]{0}', space=sflag, size = 0x4, scoped, tag = 'scoped memory for tpu_custom_call.1']
    %12 = vsyncpa [#allocation3], 0
    // Predicated region
    $region2: #{tpu_custom_call.1} parent=1 // pred_check
      _
    $region3: #{tpu_custom_call.1} parent=1 // pred_check_branch
      %14 = sbr.rel (0) target = $region5
    $region4: #{tpu_custom_call.1} parent=1 // pred_region
      _
    $region5: #{tpu_custom_call.1} parent=1 // pred_fallthru
      _
    // Predicated region
    $region6: #{tpu_custom_call.1} parent=1 // pred_check
      _
    $region7: #{tpu_custom_call.1} parent=1 // pred_check_branch
      %16 = sbr.rel (0) target = $region9
    $region8: #{tpu_custom_call.1} parent=1 // pred_region
      _
    $region9: #{tpu_custom_call.1} parent=1 // pred_fallthru
      _
    // Predicated region
    $region10: #{tpu_custom_call.1} parent=1 // pred_check
      _
    $region11: #{tpu_custom_call.1} parent=1 // pred_check_branch
      %18 = sbr.rel (0) target = $region13
    $region12: #{tpu_custom_call.1} parent=1 // pred_region
      _
    $region13: #{tpu_custom_call.1} parent=1 // pred_fallthru
      _
    // Predicated region
    $region14: #{tpu_custom_call.1} parent=1 // pred_check
      _
    $region15: #{tpu_custom_call.1} parent=1 // pred_check_branch
      %20 = sbr.rel (0) target = $region17
    $region16: #{tpu_custom_call.1} parent=1 // pred_region
      _
    $region17: #{tpu_custom_call.1} parent=1 // pred_fallthru
      _
    // Predicated region
    $region18: #{tpu_custom_call.1} parent=1 // pred_check
      _
    $region19: #{tpu_custom_call.1} parent=1 // pred_check_branch
      %22 = sbr.rel (0) target = $region21
    $region20: #{tpu_custom_call.1} parent=1 // pred_region
      _
    $region21: #{tpu_custom_call.1} parent=1 // pred_fallthru
      _
    // Predicated region
    $region22: #{tpu_custom_call.1} parent=1 // pred_check
      _
    $region23: #{tpu_custom_call.1} parent=1 // pred_check_branch
      %24 = sbr.rel (0) target = $region25
    $region24: #{tpu_custom_call.1} parent=1 // pred_region
      _
    $region25: #{tpu_custom_call.1} parent=1 // pred_fallthru
      _
    // Predicated region
    $region26: #{tpu_custom_call.1} parent=1 // pred_check
      _
    $region27: #{tpu_custom_call.1} parent=1 // pred_check_branch
      %26 = sbr.rel (0) target = $region29
    $region28: #{tpu_custom_call.1} parent=1 // pred_region
      _
    $region29: #{tpu_custom_call.1} parent=1 // pred_fallthru
      _
    %v28 = vld [vmem:[%s0] sm:$0x1]
    %v29 = vld [vmem:[%s0 + $0x1] sm:$0x1]
    %v30 = vld [vmem:[%s0 + $0x2] sm:$0x1]
    %v31 = vld [vmem:[%s0 + $0x3] sm:$0x1]
    %v32 = vld [vmem:[%s1] sm:$0xf]
    %v33 = vld [vmem:[%s1 + $0x4] sm:$0xf]
    %v34 = vld [vmem:[%s1 + $0x8] sm:$0xf]
    %v35 = vld [vmem:[%s1 + $0xc] sm:$0xf]
    %v36 = vld [vmem:[%s1 + $0x10] sm:$0xf]
    %v37 = vld [vmem:[%s1 + $0x14] sm:$0xf]
    %v38 = vld [vmem:[%s1 + $0x18] sm:$0xf]
    %v39 = vld [vmem:[%s1 + $0x1c] sm:$0xf]
    %v40 = vld [vmem:[%s1 + $0x20] sm:$0xf]
    %v41 = vld [vmem:[%s2] sm:$0x1]
    %v43 = vlaneseq
    %v44 = vshrl.u32 %v43, 7
    %v45 = vsub.s32 0, %v44
    %v46 = vrot.slane %v41, %v45
    %v52 = vcombine.low %v28, %v29
    %v53 = vcombine.low %v30, %v31
    %v55 = vunpack.c.l.s4 1966171168
    %v56 = vunpack.c.0.s8 %v55
    %v57 = vlaneseq
    %v58 = vshrl.u32 %v57, 7
    %v59 = vsub.s32 %v56, %v58
    %v60 = vrot.slane %v52, %v59
    %v62 = vunpack.c.l.s4 1966171168
    %v63 = vunpack.c.0.s8 %v62
    %v64 = vlaneseq
    %v65 = vshrl.u32 %v64, 7
    %v66 = vsub.s32 %v63, %v65
    %v67 = vrot.slane %v53, %v66
    %v68 = vcombine.low %v60, %v67
    %v70 = vunpack.c.l.s4 1966171168
    %v71 = vunpack.c.0.s8 %v70
    %v72 = vlaneseq
    %v73 = vshrl.u32 %v72, 7
    %v74 = vsub.s32 %v71, %v73
    %v75 = vrot.slane %v68, %v74
    %v85 = vunpack.c.l.b16 %v32
    %v86 = vunpack.c.l.b16 %v33
    %v87 = vunpack.c.l.b16 %v34
    %v88 = vunpack.c.l.b16 %v35
    %v89 = vunpack.c.l.b16 %v36
    %v90 = vunpack.c.l.b16 %v37
    %v91 = vunpack.c.l.b16 %v38
    %v92 = vunpack.c.l.b16 %v39
    %v93 = vunpack.c.l.b16 %v40
    %v94 = vpack.c.b16 %v86, %v85
    %v95 = vpack.c.b16 %v88, %v87
    %v96 = vpack.c.b16 %v90, %v89
    %v97 = vpack.c.b16 %v92, %v91
    %v98 = vpack.c.b16 %v93, %v93
    %vm103 = vcmask 588800
    %v105 = vsel %vm103, %v75, 0
    %vm107 = vcmask 1043456
    %v109 = vsel %vm107, %v98, 0
    %111 = vmatprep.subr.bf16.mxu0 0
    %112 = vmatpush1.bf16.msra.mxu0 0
    %113 = vmatprep.subr.bf16.mxu0 0
    %114 = vmatpush1.bf16.msra.mxu0 0
    %115 = vmatprep.subr.bf16.mxu0 0
    %116 = vmatpush1.bf16.msra.mxu0 0
    %117 = vmatprep.subr.bf16.mxu0 0
    %118 = vmatpush1.bf16.msra.mxu0 %v109
    %119 = vmatprep.subr.bf16.mxu0 0
    %120 = vmatpush1.bf16.msra.mxu0 %v97
    %121 = vmatprep.subr.bf16.mxu0 0
    %122 = vmatpush1.bf16.msra.mxu0 %v96
    %123 = vmatprep.subr.bf16.mxu0 0
    %124 = vmatpush1.bf16.msra.mxu0 %v95
    %125 = vmatprep.subr.bf16.mxu0 0
    %126 = vmatpush1.bf16.msra.mxu0 %v94
    %127 = vmatprep.subr.bf16.mxu0 0
    %128 = vmatpush2.bf16.msra.mxu0 0
    %129 = vmatprep.subr.bf16.mxu0 0
    %130 = vmatpush2.bf16.msra.mxu0 0
    %131 = vmatprep.subr.bf16.mxu0 0
    %132 = vmatpush2.bf16.msra.mxu0 0
    %133 = vmatprep.subr.bf16.mxu0 0
    %134 = vmatpush2.bf16.msra.mxu0 0
    %135 = vmatprep.subr.bf16.mxu0 0
    %136 = vmatpush2.bf16.msra.mxu0 0
    %137 = vmatprep.subr.bf16.mxu0 0
    %138 = vmatpush2.bf16.msra.mxu0 0
    %139 = vmatprep.subr.bf16.mxu0 0
    %140 = vmatpush2.bf16.msra.mxu0 0
    %141 = vmatprep.subr.bf16.mxu0 0
    %142 = vmatpush2.bf16.msra.mxu0 0
    %143 = vmatprep.mubr.bf16.mxu0 0
    %144 = vmatmul.mubr.bf16.gmra.mxu0 %v105
    %v145 = vpop.f32.mrf.mxu0
    %v146 = vadd.f32 %v46, %v145
    %v147 = vpop.f32.mrf.mxu0
    %v148 = vpop.f32.mrf.mxu0
    %v149 = vpop.f32.mrf.mxu0
    %150 = vdwg.mxu0
    %v151 = vmax.f32 %v146, 0.0
    %v152 = vpack.c.bf16 %v151, %v151
    %v153 = vld [vmem:[%s3] sm:$0xf]
    %v154 = vld [vmem:[%s3 + $0x4] sm:$0xf]
    %v155 = vld [vmem:[%s3 + $0x8] sm:$0x3]
    %v156 = vld [vmem:[%s4] sm:$0x1]
    %v158 = vlaneseq
    %v159 = vshrl.u32 %v158, 7
    %v160 = vsub.s32 0, %v159
    %v161 = vrot.slane %v156, %v160
    %v166 = vunpack.c.l.b16 %v153
    %v167 = vunpack.c.l.b16 %v154
    %v168 = vunpack.c.l.b16 %v155
    %v169 = vpack.c.b16 %v167, %v166
    %v170 = vpack.c.b16 %v168, %v168
    %vm172 = vcmask 162816
    %v174 = vsel %vm172, %v152, 0
    %vm176 = vcmask 1041408
    %v178 = vsel %vm176, %v170, 0
    %180 = vmatprep.subr.bf16.mxu0 0
    %181 = vmatpush1.bf16.msra.mxu0 0
    %182 = vmatprep.subr.bf16.mxu0 0
    %183 = vmatpush1.bf16.msra.mxu0 0
    %184 = vmatprep.subr.bf16.mxu0 0
    %185 = vmatpush1.bf16.msra.mxu0 0
    %186 = vmatprep.subr.bf16.mxu0 0
    %187 = vmatpush1.bf16.msra.mxu0 0
    %188 = vmatprep.subr.bf16.mxu0 0
    %189 = vmatpush1.bf16.msra.mxu0 0
    %190 = vmatprep.subr.bf16.mxu0 0
    %191 = vmatpush1.bf16.msra.mxu0 0
    %192 = vmatprep.subr.bf16.mxu0 0
    %193 = vmatpush1.bf16.msra.mxu0 %v178
    %194 = vmatprep.subr.bf16.mxu0 0
    %195 = vmatpush1.bf16.msra.mxu0 %v169
    %196 = vmatprep.subr.bf16.mxu0 0
    %197 = vmatpush2.bf16.msra.mxu0 0
    %198 = vmatprep.subr.bf16.mxu0 0
    %199 = vmatpush2.bf16.msra.mxu0 0
    %200 = vmatprep.subr.bf16.mxu0 0
    %201 = vmatpush2.bf16.msra.mxu0 0
    %202 = vmatprep.subr.bf16.mxu0 0
    %203 = vmatpush2.bf16.msra.mxu0 0
    %204 = vmatprep.subr.bf16.mxu0 0
    %205 = vmatpush2.bf16.msra.mxu0 0
    %206 = vmatprep.subr.bf16.mxu0 0
    %207 = vmatpush2.bf16.msra.mxu0 0
    %208 = vmatprep.subr.bf16.mxu0 0
    %209 = vmatpush2.bf16.msra.mxu0 0
    %210 = vmatprep.subr.bf16.mxu0 0
    %211 = vmatpush2.bf16.msra.mxu0 0
    %212 = vmatprep.mubr.bf16.mxu0 0
    %213 = vmatmul.mubr.bf16.gmra.mxu0 %v174
    %v214 = vpop.f32.mrf.mxu0
    %v215 = vadd.f32 %v161, %v214
    %v216 = vpop.f32.mrf.mxu0
    %v217 = vpop.f32.mrf.mxu0
    %v218 = vpop.f32.mrf.mxu0
    %219 = vdwg.mxu0
    %v220 = vmax.f32 %v215, 0.0
    %v221 = vpack.c.bf16 %v220, %v220
    %v222 = vld [vmem:[%s5] sm:$0xf]
    %v223 = vld [vmem:[%s5 + $0x4] sm:$0x1]
    %v224 = vld [vmem:[%s6] sm:$0x1]
    %v226 = vlaneseq
    %v227 = vshrl.u32 %v226, 7
    %v228 = vsub.s32 0, %v227
    %v229 = vrot.slane %v224, %v228
    %v233 = vunpack.c.l.b16 %v222
    %v234 = vunpack.c.l.b16 %v223
    %v235 = vpack.c.b16 %v234, %v233
    %vm236 = vcmask 80896
    %v238 = vsel %vm236, %v221, 0
    %vm240 = vcmask 1044480
    %v242 = vsel %vm240, %v235, 0
    %244 = vmatprep.subr.bf16.mxu0 0
    %245 = vmatpush1.bf16.msra.mxu0 0
    %246 = vmatprep.subr.bf16.mxu0 0
    %247 = vmatpush1.bf16.msra.mxu0 0
    %248 = vmatprep.subr.bf16.mxu0 0
    %249 = vmatpush1.bf16.msra.mxu0 0
    %250 = vmatprep.subr.bf16.mxu0 0
    %251 = vmatpush1.bf16.msra.mxu0 0
    %252 = vmatprep.subr.bf16.mxu0 0
    %253 = vmatpush1.bf16.msra.mxu0 0
    %254 = vmatprep.subr.bf16.mxu0 0
    %255 = vmatpush1.bf16.msra.mxu0 0
    %256 = vmatprep.subr.bf16.mxu0 0
    %257 = vmatpush1.bf16.msra.mxu0 0
    %258 = vmatprep.subr.bf16.mxu0 0
    %259 = vmatpush1.bf16.msra.mxu0 %v242
    %260 = vmatprep.subr.bf16.mxu0 0
    %261 = vmatpush2.bf16.msra.mxu0 0
    %262 = vmatprep.subr.bf16.mxu0 0
    %263 = vmatpush2.bf16.msra.mxu0 0
    %264 = vmatprep.subr.bf16.mxu0 0
    %265 = vmatpush2.bf16.msra.mxu0 0
    %266 = vmatprep.subr.bf16.mxu0 0
    %267 = vmatpush2.bf16.msra.mxu0 0
    %268 = vmatprep.subr.bf16.mxu0 0
    %269 = vmatpush2.bf16.msra.mxu0 0
    %270 = vmatprep.subr.bf16.mxu0 0
    %271 = vmatpush2.bf16.msra.mxu0 0
    %272 = vmatprep.subr.bf16.mxu0 0
    %273 = vmatpush2.bf16.msra.mxu0 0
    %274 = vmatprep.subr.bf16.mxu0 0
    %275 = vmatpush2.bf16.msra.mxu0 0
    %276 = vmatprep.mubr.bf16.mxu0 0
    %277 = vmatmul.mubr.bf16.gmra.mxu0 %v238
    %v278 = vpop.f32.mrf.mxu0
    %v279 = vadd.f32 %v229, %v278
    %v280 = vpop.f32.mrf.mxu0
    %v281 = vpop.f32.mrf.mxu0
    %v282 = vpop.f32.mrf.mxu0
    %283 = vdwg.mxu0
    %284 = vst.msk [vmem:[#allocation2] sm:$0xff] %vm236, %v279
    // Predicated region
    $region30: #{tpu_custom_call.1} parent=1 // pred_check
      _
    $region31: #{tpu_custom_call.1} parent=1 // pred_check_branch
      %286 = sbr.rel (0) target = $region33
    $region32: #{tpu_custom_call.1} parent=1 // pred_region
      %s288 = ssub.s32 128, 32
      %289 = vsyncadd [#allocation3], %s288
      %s290 = sshll.u32 [#allocation2], 4
      %s291 = int_to_ptr.vmem [resolvable:$true] %s290
      %296 = dma.vmem_to_hbm [thread:$0]  %s291, 32, %s7, [#allocation3], 32, 32, 2
    $region33: #{tpu_custom_call.1} parent=1 // pred_fallthru
      _
    // Predicated region
    $region34: #{tpu_custom_call.1} parent=1 // pred_check
      _
    $region35: #{tpu_custom_call.1} parent=1 // pred_check_branch
      %298 = sbr.rel (0) target = $region37
    $region36: #{tpu_custom_call.1} parent=1 // pred_region
      %299 = dma.done [#allocation3], 128
    $region37: #{tpu_custom_call.1} parent=1 // pred_fallthru
      _
    %300 = vsyncpa [#allocation3], 1

</llo_original>
